<compile_context>
chip_gen: v7x
topology: tpu7x:2x2x1
jax: 0.10.0
libtpu: 0.0.40
codegen_flags: <defaults>
</compile_context>

<pallas_src>
import math

import jax
import jax.numpy as jnp
from jax.experimental import pallas as pl
from jax.experimental.pallas import tpu as pltpu

_MIB = 1024 * 1024


def _broadcast_kernel(param_ref, out_ref):
    # param_ref: (TP, D)        VMEM tile of the structure encoding
    # out_ref:   (TP, bs * D)   lane-dense row-major view of (TP, bs, D)
    p = param_ref[...]                         # (TP, D)
    d = p.shape[1]
    nb = out_ref.shape[1] // d                 # == bs (static)
    if nb == 1:
        out_ref[...] = p
    elif (d % 128 == 0) and nb <= 16:
        # Lane-aligned, unmasked slab stores streaming straight from the
        # loaded parameter rows (no vreg shuffling; friendly to v5e's 1 vst).
        for b in range(nb):                    # small static unrolled loop
            out_ref[:, b * d:(b + 1) * d] = p
    else:
        # d_model not 128-aligned (per-slab stores would be masked + rotated)
        # or many copies (avoid bundle bloat): build the full lane-dense row
        # in vregs and issue one full-block store.
        out_ref[...] = jnp.concatenate([p] * nb, axis=1)


def _vmem_budget_bytes():
    """Generation-aware VMEM budget: ~75% of physical, clamped to [32, 100] MiB.

    -> ~48 MiB on v7x (64 MiB physical), ~96 MiB on v5e/v6e (128 MiB physical).
    """
    try:
        phys = pltpu.get_tpu_info().vmem_capacity_bytes
    except Exception:
        phys = 64 * _MIB                       # conservative fallback
    return int(min(100 * _MIB, max(32 * _MIB, int(phys * 0.75))))


def _choose_tp(num_points, bs, d_model, itemsize, vmem_limit_bytes):
    """Pick a point-tile size.

    * double-buffered in + out tiles fit ~85% of the VMEM budget (per_point
      already carries the x2 double-buffer factor; no extra halving),
    * aligned to the dtype's packed sublane count,
    * small enough to give >= 4 grid steps when possible (pipelined writeback,
      2+ steps per TensorCore on v7x),
    * never exceeds the cap (no un-pipelined giant fallback block).
    """
    sublane = max(8, 32 // itemsize)           # 8 f32, 16 bf16, 32 int8
    if num_points <= sublane:
        return num_points                      # full dim; (8,128) rule satisfied
    per_point = (d_model + bs * d_model) * itemsize * 2   # in + out, 2x buffered
    cap = max(1, int(vmem_limit_bytes * 0.85) // per_point)
    target = pl.cdiv(num_points, 4)            # aim for >= 4 grid steps
    tp = min(cap, target, num_points)
    tp = max(sublane, (tp // sublane) * sublane)
    return min(tp, num_points)


def transformer_forward(src, structure_encoding, *, vmem_limit_bytes=None):
    """Pallas equivalent of Transformer.forward.

    src:                 (bs, num_feat, len_feat)  -- values unused, bs from shape
    structure_encoding:  (1, num_points, d_model)  -- the learned parameter
    returns:             (num_points, bs, d_model)
    """
    bs = src.shape[0]
    _, num_points, d_model = structure_encoding.shape
    param2d = structure_encoding.reshape(num_points, d_model)
    itemsize = jnp.dtype(param2d.dtype).itemsize

    if vmem_limit_bytes is None:
        vmem_limit_bytes = _vmem_budget_bytes()
    tp = _choose_tp(num_points, bs, d_model, itemsize, vmem_limit_bytes)
    grid = (pl.cdiv(num_points, tp),)          # partial last block allowed

    bytes_accessed = (1 + bs) * num_points * d_model * itemsize

    out2d = pl.pallas_call(
        _broadcast_kernel,
        out_shape=jax.ShapeDtypeStruct((num_points, bs * d_model), param2d.dtype),
        grid_spec=pltpu.PrefetchScalarGridSpec(
            num_scalar_prefetch=0,
            grid=grid,
            in_specs=[pl.BlockSpec((tp, d_model), lambda i: (i, 0))],
            out_specs=pl.BlockSpec((tp, bs * d_model), lambda i: (i, 0)),
        ),
        compiler_params=pltpu.CompilerParams(
            dimension_semantics=("parallel",),
            vmem_limit_bytes=vmem_limit_bytes,
        ),
        cost_estimate=pl.CostEstimate(
            flops=0, transcendentals=0, bytes_accessed=bytes_accessed),
    )(param2d)

    # Zero-cost reshape: (num_points, bs*d_model) row-major is byte-identical
    # to (num_points, bs, d_model).
    return out2d.reshape(num_points, bs, d_model)


def init_structure_encoding(key, num_points, d_model, dtype=jnp.float32):
    # Matches nn.init.xavier_uniform_ on a (1, num_points, d_model) parameter:
    #   fan_in  = size(1) * receptive_field = num_points * d_model
    #   fan_out = size(0) * receptive_field = 1 * d_model
    fan_in = num_points * d_model
    fan_out = d_model
    bound = math.sqrt(6.0 / (fan_in + fan_out))
    return jax.random.uniform(
        key, (1, num_points, d_model), dtype=dtype, minval=-bound, maxval=bound
    )


def _reference(src, structure_encoding):
    bs = src.shape[0]
    _, num_points, d_model = structure_encoding.shape
    return jnp.transpose(
        jnp.broadcast_to(structure_encoding, (bs, num_points, d_model)), (1, 0, 2)
    )


if __name__ == "__main__":
    key = jax.random.PRNGKey(0)
    k1, k2, k3, k4 = jax.random.split(key, 4)

    # Case 1: module-default d_model (lane-aligned slab-store path).
    bs, num_feat, len_feat = 2, 4, 16
    num_points, d_model = 8, 256
    se1 = init_structure_encoding(k1, num_points, d_model)
    src1 = jax.random.normal(k2, (bs, num_feat, len_feat), dtype=jnp.float32)
    out1 = jax.block_until_ready(transformer_forward(src1, se1))
    assert out1.shape == (num_points, bs, d_model), out1.shape
    assert jnp.allclose(out1, _reference(src1, se1)), "case 1 mismatch vs reference"

    # Case 2: non-128-aligned d_model + multi-step grid (full-row store path).
    bs2, num_points2, d_model2 = 3, 20, 96
    se2 = init_structure_encoding(k3, num_points2, d_model2)
    src2 = jax.random.normal(k4, (bs2, num_feat, len_feat), dtype=jnp.float32)
    out2 = jax.block_until_ready(transformer_forward(src2, se2))
    assert out2.shape == (num_points2, bs2, d_model2), out2.shape
    assert jnp.allclose(out2, _reference(src2, se2)), "case 2 mismatch vs reference"

    print("KERNEL_OK")
</pallas_src>

<mosaic_0001>
module attributes {stable_mosaic.version = 11 : i64} {
  func.func @_broadcast_kernel(%arg0: i32, %arg1: memref<8x256xf32, #tpu.memory_space<vmem>>, %arg2: memref<8x512xf32, #tpu.memory_space<vmem>>) attributes {dimension_semantics = [#tpu.dimension_semantics<parallel>], iteration_bounds = array<i64: 1>, scalar_prefetch = 0 : i64, scratch_operands = 0 : i64, tpu.core_type = #tpu.core_type<tc>, window_params = [{transform_indices = @transform_0, window_bounds = array<i64: 8, 256>}, {transform_indices = @transform_1, window_bounds = array<i64: 8, 512>}]} {
    %c0 = arith.constant 0 : index
    %c0_0 = arith.constant 0 : index
    %0 = vector.load %arg1[%c0, %c0_0] : memref<8x256xf32, #tpu.memory_space<vmem>>, vector<8x256xf32>
    %c0_1 = arith.constant 0 : index
    %c0_2 = arith.constant 0 : index
    %1 = vector.load %arg2[%c0_1, %c0_2] : memref<8x512xf32, #tpu.memory_space<vmem>>, vector<8x256xf32>
    tpu.vector_store %arg2[%c0_1, %c0_2], %0 {strides = array<i32>} : memref<8x512xf32, #tpu.memory_space<vmem>>, vector<8x256xf32>,
    %c0_3 = arith.constant 0 : index
    %c256 = arith.constant 256 : index
    %2 = vector.load %arg2[%c0_3, %c256] : memref<8x512xf32, #tpu.memory_space<vmem>>, vector<8x256xf32>
    tpu.vector_store %arg2[%c0_3, %c256], %0 {strides = array<i32>} : memref<8x512xf32, #tpu.memory_space<vmem>>, vector<8x256xf32>,
    return
  }
  func.func @transform_0(%arg0: i32) -> (i32, i32) {
    %c0_i32 = arith.constant 0 : i32
    %c0_i32_0 = arith.constant 0 : i32
    return %arg0, %c0_i32 : i32, i32
  }
  func.func @transform_1(%arg0: i32) -> (i32, i32) {
    %c0_i32 = arith.constant 0 : i32
    %c0_i32_0 = arith.constant 0 : i32
    return %arg0, %c0_i32 : i32, i32
  }
}

</mosaic_0001>

<llo_original>
// kernel: tpu_custom_call.1
$region0: #{tpu_custom_call.1}
  #allocation0 [shape = 'u32[]', space=smem, size = 0x4, offset = 0x4, fixed_abs, tag = 'smem constant byte address 0x4 - core index']
  #allocation1 [shape = 'u32[144,128]{1,0:T(1,128)}', space=vmem, size = 0x12000, scoped, tag = 'internal scratch']
  %s0 = inlined_call_operand.hbm [shape: f32[8,256], index: 0, kind: input, shape index: {}]
  %s1 = inlined_call_operand.hbm [shape: f32[8,512], index: 1, kind: output, shape index: {}]
  %s2 = sld [smem:[#allocation0]]
  $region18: #{tpu_custom_call.1} parent=0
    _
  %s4 = ssub.s32 1, %s2
  %s5 = scalar_select 0, %s4, %s2
  $region1: #{tpu_custom_call.1} parent=0
    #allocation2 [shape = 'u8[8192]{0}', space=vmem, size = 0x2000, scoped, tag = 'input window, operand 0, single buffered']
    #allocation3 [shape = 's32[1]{0}', space=sflag, size = 0x4, scoped, tag = 'scoped memory for tpu_custom_call.1']
    #allocation4 [shape = 's32[1]{0}', space=sflag, size = 0x4, scoped, tag = 'scoped memory for tpu_custom_call.1']
    #allocation5 [shape = 'u8[16384]{0}', space=vmem, size = 0x4000, scoped, tag = 'output window, operand 0, single buffered']
    %6 = vsyncpa [#allocation3], 0
    %7 = vsyncpa [#allocation4], 0
    // Predicated region
    $region2: #{tpu_custom_call.1} parent=1 // pred_check
      _
    $region3: #{tpu_custom_call.1} parent=1 // pred_check_branch
      %9 = sbr.rel (0) target = $region5
    $region4: #{tpu_custom_call.1} parent=1 // pred_region
      %s11 = ssub.s32 256, 256
      %12 = vsyncadd [#allocation3], %s11
      %s14 = sshll.u32 [#allocation2], 4
      %s15 = int_to_ptr.vmem [resolvable:$true] %s14
      %17 = dma.hbm_to_vmem [thread:$0]  %s0, 256, %s15, [#allocation3]
    $region5: #{tpu_custom_call.1} parent=1 // pred_fallthru
      _
    // Predicated region
    $region6: #{tpu_custom_call.1} parent=1 // pred_check
      _
    $region7: #{tpu_custom_call.1} parent=1 // pred_check_branch
      %19 = sbr.rel (0) target = $region9
    $region8: #{tpu_custom_call.1} parent=1 // pred_region
      %20 = dma.done [#allocation3], 256
    $region9: #{tpu_custom_call.1} parent=1 // pred_fallthru
      _
    %v21 = vld [vmem:[#allocation2] sm:$0xff]
    %v22 = vld [vmem:[#allocation2 + $0x8] sm:$0xff]
    %23 = vst [vmem:[#allocation5] sm:$0xff] %v21
    %24 = vst [vmem:[#allocation5 + $0x8] sm:$0xff] %v22
    %25 = vst [vmem:[#allocation5 + $0x10] sm:$0xff] %v21
    %26 = vst [vmem:[#allocation5 + $0x18] sm:$0xff] %v22
    // Predicated region
    $region10: #{tpu_custom_call.1} parent=1 // pred_check
      _
    $region11: #{tpu_custom_call.1} parent=1 // pred_check_branch
      %28 = sbr.rel (0) target = $region13
    $region12: #{tpu_custom_call.1} parent=1 // pred_region
      %s30 = ssub.s32 512, 512
      %31 = vsyncadd [#allocation4], %s30
      %s33 = sshll.u32 [#allocation5], 4
      %s34 = int_to_ptr.vmem [resolvable:$true] %s33
      %36 = dma.vmem_to_hbm [thread:$0]  %s34, 512, %s1, [#allocation4]
    $region13: #{tpu_custom_call.1} parent=1 // pred_fallthru
      _
    // Predicated region
    $region14: #{tpu_custom_call.1} parent=1 // pred_check
      _
    $region15: #{tpu_custom_call.1} parent=1 // pred_check_branch
      %38 = sbr.rel (0) target = $region17
    $region16: #{tpu_custom_call.1} parent=1 // pred_region
      %39 = dma.done [#allocation4], 512
    $region17: #{tpu_custom_call.1} parent=1 // pred_fallthru
      _
    %40 = vsyncpa [#allocation3], 1
    %41 = vsyncpa [#allocation4], 1

</llo_original>
